<compile_context>
chip_gen: v5e
topology: v5e:2x2
jax: 0.10.0
libtpu: 0.0.40
codegen_flags: <defaults>
</compile_context>

<pallas_src>
import math

import jax
import jax.numpy as jnp
from jax.experimental import pallas as pl
from jax.experimental.pallas import tpu as pltpu


def _ffn_fused_kernel(x_ref, w1_ref, b1_ref, w2_ref, b2_ref, o_ref):
    # dense1: (tm, d_in) @ (d_in, d_hid) -> f32 accumulator on the MXU.
    h = jnp.dot(x_ref[...], w1_ref[...], preferred_element_type=jnp.float32)
    h = h + b1_ref[...].astype(jnp.float32)          # bias broadcast (1, d_hid)
    h = jnp.maximum(h, 0.0)                          # ReLU on the f32 accumulator
    # dense2: (tm, d_hid) @ (d_hid, d_out) -> f32 accumulator, hidden never
    # leaves VMEM.
    y = jnp.dot(h.astype(w2_ref.dtype), w2_ref[...],
                preferred_element_type=jnp.float32)
    y = y + b2_ref[...].astype(jnp.float32)
    o_ref[...] = y.astype(o_ref.dtype)


def _round_up(x, m):
    return ((x + m - 1) // m) * m


def position_wise_ffn(X, w1, b1, w2, b2, *, tm=256):
    """Fused dense1 -> ReLU -> dense2 (PositionWiseFFN.forward).

    X : (..., d_in)  float array (any number of leading dims).
    w1: (d_in, d_hid), b1: (d_hid,)
    w2: (d_hid, d_out), b2: (d_out,)
    Returns (..., d_out).
    """
    lead_shape = X.shape[:-1]
    d_in = X.shape[-1]
    d_hid = w1.shape[1]
    d_out = w2.shape[1]

    M = int(math.prod(lead_shape)) if lead_shape else 1
    x2d = X.reshape(M, d_in)

    # Token tile: multiple of 8 (sublane), capped at `tm`; pad M if needed.
    tm_eff = min(tm, _round_up(M, 8))
    m_pad = _round_up(M, tm_eff)
    if m_pad != M:
        x2d = jnp.pad(x2d, ((0, m_pad - M), (0, 0)))

    b1_2d = b1.reshape(1, d_hid)
    b2_2d = b2.reshape(1, d_out)

    grid = (m_pad // tm_eff,)

    out2d = pl.pallas_call(
        _ffn_fused_kernel,
        out_shape=jax.ShapeDtypeStruct((m_pad, d_out), X.dtype),
        grid_spec=pltpu.PrefetchScalarGridSpec(
            num_scalar_prefetch=0,
            grid=grid,
            in_specs=[
                pl.BlockSpec((tm_eff, d_in), lambda i: (i, 0)),   # X tile (streamed)
                pl.BlockSpec((d_in, d_hid), lambda i: (0, 0)),    # W1 (resident)
                pl.BlockSpec((1, d_hid), lambda i: (0, 0)),       # b1 (resident)
                pl.BlockSpec((d_hid, d_out), lambda i: (0, 0)),   # W2 (resident)
                pl.BlockSpec((1, d_out), lambda i: (0, 0)),       # b2 (resident)
            ],
            out_specs=pl.BlockSpec((tm_eff, d_out), lambda i: (i, 0)),
        ),
        compiler_params=pltpu.CompilerParams(
            dimension_semantics=("parallel",),
        ),
    )(x2d, w1, b1_2d, w2, b2_2d)

    return out2d[:M].reshape(*lead_shape, d_out)


if __name__ == "__main__":
    # Small shapes consistent with the module: tokens = batch*seq positions,
    # each passed through the same position-wise FFN.
    batch, seq = 2, 8
    ffn_num_input, ffn_num_hiddens, ffn_num_outputs = 32, 64, 32

    key = jax.random.PRNGKey(0)
    kx, kw1, kb1, kw2, kb2 = jax.random.split(key, 5)

    X = jax.random.normal(kx, (batch, seq, ffn_num_input), dtype=jnp.float32)
    W1 = 0.1 * jax.random.normal(kw1, (ffn_num_input, ffn_num_hiddens), dtype=jnp.float32)
    b1 = 0.1 * jax.random.normal(kb1, (ffn_num_hiddens,), dtype=jnp.float32)
    W2 = 0.1 * jax.random.normal(kw2, (ffn_num_hiddens, ffn_num_outputs), dtype=jnp.float32)
    b2 = 0.1 * jax.random.normal(kb2, (ffn_num_outputs,), dtype=jnp.float32)

    y = position_wise_ffn(X, W1, b1, W2, b2)
    y = jax.block_until_ready(y)

    # Pure-JAX reference of dense2(relu(dense1(X))).
    ref = jnp.maximum(X.reshape(-1, ffn_num_input) @ W1 + b1, 0.0) @ W2 + b2
    ref = ref.reshape(batch, seq, ffn_num_outputs)

    assert y.shape == ref.shape and y.dtype == ref.dtype
    # Loose tolerance to accommodate MXU f32 matmul precision modes.
    assert bool(jnp.allclose(y, ref, rtol=1e-2, atol=1e-1))

    print("KERNEL_OK")
</pallas_src>

<mosaic_0001>
module attributes {stable_mosaic.version = 11 : i64} {
  func.func @_ffn_fused_kernel(%arg0: i32, %arg1: memref<16x32xf32, #tpu.memory_space<vmem>>, %arg2: memref<32x64xf32, #tpu.memory_space<vmem>>, %arg3: memref<1x64xf32, #tpu.memory_space<vmem>>, %arg4: memref<64x32xf32, #tpu.memory_space<vmem>>, %arg5: memref<1x32xf32, #tpu.memory_space<vmem>>, %arg6: memref<16x32xf32, #tpu.memory_space<vmem>>) attributes {dimension_semantics = [#tpu.dimension_semantics<parallel>], iteration_bounds = array<i64: 1>, scalar_prefetch = 0 : i64, scratch_operands = 0 : i64, tpu.core_type = #tpu.core_type<tc>, window_params = [{transform_indices = @transform_0, window_bounds = array<i64: 16, 32>}, {pipeline_mode = #tpu.pipeline_mode<synchronous>, transform_indices = @transform_1, window_bounds = array<i64: 32, 64>}, {pipeline_mode = #tpu.pipeline_mode<synchronous>, transform_indices = @transform_2, window_bounds = array<i64: 1, 64>}, {pipeline_mode = #tpu.pipeline_mode<synchronous>, transform_indices = @transform_3, window_bounds = array<i64: 64, 32>}, {pipeline_mode = #tpu.pipeline_mode<synchronous>, transform_indices = @transform_4, window_bounds = array<i64: 1, 32>}, {transform_indices = @transform_5, window_bounds = array<i64: 16, 32>}]} {
    %c0 = arith.constant 0 : index
    %c0_0 = arith.constant 0 : index
    %0 = vector.load %arg1[%c0, %c0_0] : memref<16x32xf32, #tpu.memory_space<vmem>>, vector<16x32xf32>
    %c0_1 = arith.constant 0 : index
    %c0_2 = arith.constant 0 : index
    %1 = vector.load %arg2[%c0_1, %c0_2] : memref<32x64xf32, #tpu.memory_space<vmem>>, vector<32x64xf32>
    %cst = arith.constant dense<0.000000e+00> : vector<16x64xf32>
    %2 = tpu.matmul %0, %1, %cst {dimension_numbers = #tpu.dot_dimension_numbers<[1], [0], [0], [1], [0, 0, 1, 1], [], []>} : vector<16x32xf32>, vector<32x64xf32>, vector<16x64xf32> -> vector<16x64xf32>
    %c0_3 = arith.constant 0 : index
    %c0_4 = arith.constant 0 : index
    %3 = vector.load %arg3[%c0_3, %c0_4] : memref<1x64xf32, #tpu.memory_space<vmem>>, vector<1x64xf32>
    %4 = vector.broadcast %3 : vector<1x64xf32> to vector<16x64xf32>
    %5 = arith.addf %2, %4 : vector<16x64xf32>
    %cst_5 = arith.constant 0.000000e+00 : f32
    %6 = vector.broadcast %cst_5 : f32 to vector<16x64xf32>
    %7 = arith.maximumf %5, %6 : vector<16x64xf32>
    %c0_6 = arith.constant 0 : index
    %c0_7 = arith.constant 0 : index
    %8 = vector.load %arg4[%c0_6, %c0_7] : memref<64x32xf32, #tpu.memory_space<vmem>>, vector<64x32xf32>
    %cst_8 = arith.constant dense<0.000000e+00> : vector<16x32xf32>
    %9 = tpu.matmul %7, %8, %cst_8 {dimension_numbers = #tpu.dot_dimension_numbers<[1], [0], [0], [1], [0, 0, 1, 1], [], []>} : vector<16x64xf32>, vector<64x32xf32>, vector<16x32xf32> -> vector<16x32xf32>
    %c0_9 = arith.constant 0 : index
    %c0_10 = arith.constant 0 : index
    %10 = vector.load %arg5[%c0_9, %c0_10] : memref<1x32xf32, #tpu.memory_space<vmem>>, vector<1x32xf32>
    %11 = vector.broadcast %10 : vector<1x32xf32> to vector<16x32xf32>
    %12 = arith.addf %9, %11 : vector<16x32xf32>
    %c0_11 = arith.constant 0 : index
    %c0_12 = arith.constant 0 : index
    %13 = vector.load %arg6[%c0_11, %c0_12] : memref<16x32xf32, #tpu.memory_space<vmem>>, vector<16x32xf32>
    tpu.vector_store %arg6[%c0_11, %c0_12], %12 {strides = array<i32>} : memref<16x32xf32, #tpu.memory_space<vmem>>, vector<16x32xf32>,
    return
  }
  func.func @transform_0(%arg0: i32) -> (i32, i32) {
    %c0_i32 = arith.constant 0 : i32
    %c0_i32_0 = arith.constant 0 : i32
    return %arg0, %c0_i32 : i32, i32
  }
  func.func @transform_1(%arg0: i32) -> (i32, i32) {
    %c0_i32 = arith.constant 0 : i32
    %c0_i32_0 = arith.constant 0 : i32
    %c0_i32_1 = arith.constant 0 : i32
    return %c0_i32, %c0_i32_0 : i32, i32
  }
  func.func @transform_2(%arg0: i32) -> (i32, i32) {
    %c0_i32 = arith.constant 0 : i32
    %c0_i32_0 = arith.constant 0 : i32
    %c0_i32_1 = arith.constant 0 : i32
    return %c0_i32, %c0_i32_0 : i32, i32
  }
  func.func @transform_3(%arg0: i32) -> (i32, i32) {
    %c0_i32 = arith.constant 0 : i32
    %c0_i32_0 = arith.constant 0 : i32
    %c0_i32_1 = arith.constant 0 : i32
    return %c0_i32, %c0_i32_0 : i32, i32
  }
  func.func @transform_4(%arg0: i32) -> (i32, i32) {
    %c0_i32 = arith.constant 0 : i32
    %c0_i32_0 = arith.constant 0 : i32
    %c0_i32_1 = arith.constant 0 : i32
    return %c0_i32, %c0_i32_0 : i32, i32
  }
  func.func @transform_5(%arg0: i32) -> (i32, i32) {
    %c0_i32 = arith.constant 0 : i32
    %c0_i32_0 = arith.constant 0 : i32
    return %arg0, %c0_i32 : i32, i32
  }
}

</mosaic_0001>

<llo_original>
// kernel: tpu_custom_call.1
$region0: #{tpu_custom_call.1}
  #allocation0 [shape = 'u32[]', space=smem, size = 0x4, offset = 0x4, fixed_abs, tag = 'smem constant byte address 0x4 - core index']
  #allocation1 [shape = 'u32[72,128]{1,0:T(1,128)}', space=vmem, size = 0x9000, scoped, tag = 'internal scratch']
  %s0 = inlined_call_operand.vmem [shape: f32[16,32], index: 0, kind: input, shape index: {}]
  %s1 = inlined_call_operand.vmem [shape: f32[32,64], index: 1, kind: input, shape index: {}]
  %s2 = inlined_call_operand.vmem [shape: f32[1,64], index: 2, kind: input, shape index: {}]
  %s3 = inlined_call_operand.vmem [shape: f32[64,32], index: 3, kind: input, shape index: {}]
  %s4 = inlined_call_operand.vmem [shape: f32[1,32], index: 4, kind: input, shape index: {}]
  %s5 = inlined_call_operand.hbm [shape: f32[16,32], index: 5, kind: output, shape index: {}]
  %s6 = sld [smem:[#allocation0]]
  $region30: #{tpu_custom_call.1} parent=0
    _
  %s8 = ssub.s32 1, %s6
  %s9 = scalar_select 0, %s8, %s6
  $region1: #{tpu_custom_call.1} parent=0
    #allocation2 [shape = 'u8[8192]{0}', space=vmem, size = 0x2000, scoped, tag = 'output window, operand 0, single buffered']
    #allocation3 [shape = 's32[1]{0}', space=sflag, size = 0x4, scoped, tag = 'scoped memory for tpu_custom_call.1']
    %10 = vsyncpa [#allocation3], 0
    // Predicated region
    $region2: #{tpu_custom_call.1} parent=1 // pred_check
      _
    $region3: #{tpu_custom_call.1} parent=1 // pred_check_branch
      %12 = sbr.rel (0) target = $region5
    $region4: #{tpu_custom_call.1} parent=1 // pred_region
      _
    $region5: #{tpu_custom_call.1} parent=1 // pred_fallthru
      _
    // Predicated region
    $region6: #{tpu_custom_call.1} parent=1 // pred_check
      _
    $region7: #{tpu_custom_call.1} parent=1 // pred_check_branch
      %14 = sbr.rel (0) target = $region9
    $region8: #{tpu_custom_call.1} parent=1 // pred_region
      _
    $region9: #{tpu_custom_call.1} parent=1 // pred_fallthru
      _
    // Predicated region
    $region10: #{tpu_custom_call.1} parent=1 // pred_check
      _
    $region11: #{tpu_custom_call.1} parent=1 // pred_check_branch
      %16 = sbr.rel (0) target = $region13
    $region12: #{tpu_custom_call.1} parent=1 // pred_region
      _
    $region13: #{tpu_custom_call.1} parent=1 // pred_fallthru
      _
    // Predicated region
    $region14: #{tpu_custom_call.1} parent=1 // pred_check
      _
    $region15: #{tpu_custom_call.1} parent=1 // pred_check_branch
      %18 = sbr.rel (0) target = $region17
    $region16: #{tpu_custom_call.1} parent=1 // pred_region
      _
    $region17: #{tpu_custom_call.1} parent=1 // pred_fallthru
      _
    // Predicated region
    $region18: #{tpu_custom_call.1} parent=1 // pred_check
      _
    $region19: #{tpu_custom_call.1} parent=1 // pred_check_branch
      %20 = sbr.rel (0) target = $region21
    $region20: #{tpu_custom_call.1} parent=1 // pred_region
      _
    $region21: #{tpu_custom_call.1} parent=1 // pred_fallthru
      _
    %v21 = vld [vmem:[%s0] sm:$0xff]
    %v22 = vld [vmem:[%s0 + $0x8] sm:$0xff]
    %v23 = vld [vmem:[%s1] sm:$0xff]
    %v24 = vld [vmem:[%s1 + $0x8] sm:$0xff]
    %v25 = vld [vmem:[%s1 + $0x10] sm:$0xff]
    %v26 = vld [vmem:[%s1 + $0x18] sm:$0xff]
    %v27 = vld [vmem:[%s2] sm:$0x1]
    %v29 = vperm.slane %v27, 0
    %vm31 = vcmask 261120
    %v33 = vsel %vm31, %v21, 0
    %v36 = vsel %vm31, %v22, 0
    %38 = vmatpush.msra.mxu0 0.0
    %39 = vmatpush.msra.mxu0 0.0
    %40 = vmatpush.msra.mxu0 0.0
    %41 = vmatpush.msra.mxu0 0.0
    %42 = vmatpush.msra.mxu0 0.0
    %43 = vmatpush.msra.mxu0 0.0
    %44 = vmatpush.msra.mxu0 0.0
    %45 = vmatpush.msra.mxu0 0.0
    %46 = vmatpush.msra.mxu0 0.0
    %47 = vmatpush.msra.mxu0 0.0
    %48 = vmatpush.msra.mxu0 0.0
    %49 = vmatpush.msra.mxu0 0.0
    %50 = vmatpush.msra.mxu0 %v26
    %51 = vmatpush.msra.mxu0 %v25
    %52 = vmatpush.msra.mxu0 %v24
    %53 = vmatpush.msra.mxu0 %v23
    %54 = vmatmul.f32.gmra.mxu0 %v33
    %v55 = vpop.f32.mrf.mxu0
    %v56 = vadd.f32 %v29, %v55
    %57 = vmatmul.f32.gmra.mxu0 %v36
    %v58 = vpop.f32.mrf.mxu0
    %v59 = vadd.f32 %v29, %v58
    %60 = vdwg.mxu0
    %v61 = vmax.f32 %v56, 0.0
    %v62 = vmax.f32 %v59, 0.0
    %v63 = vld [vmem:[%s3] sm:$0xff]
    %v64 = vld [vmem:[%s3 + $0x8] sm:$0xff]
    %v65 = vld [vmem:[%s3 + $0x10] sm:$0xff]
    %v66 = vld [vmem:[%s3 + $0x18] sm:$0xff]
    %v67 = vld [vmem:[%s3 + $0x20] sm:$0xff]
    %v68 = vld [vmem:[%s3 + $0x28] sm:$0xff]
    %v69 = vld [vmem:[%s3 + $0x30] sm:$0xff]
    %v70 = vld [vmem:[%s3 + $0x38] sm:$0xff]
    %v71 = vld [vmem:[%s4] sm:$0x1]
    %v73 = vperm.slane %v71, 0
    %vm75 = vcmask 523264
    %v77 = vsel %vm75, %v61, 0
    %v80 = vsel %vm75, %v62, 0
    %82 = vmatpush.msra.mxu0 0.0
    %83 = vmatpush.msra.mxu0 0.0
    %84 = vmatpush.msra.mxu0 0.0
    %85 = vmatpush.msra.mxu0 0.0
    %86 = vmatpush.msra.mxu0 0.0
    %87 = vmatpush.msra.mxu0 0.0
    %88 = vmatpush.msra.mxu0 0.0
    %89 = vmatpush.msra.mxu0 0.0
    %90 = vmatpush.msra.mxu0 %v70
    %91 = vmatpush.msra.mxu0 %v69
    %92 = vmatpush.msra.mxu0 %v68
    %93 = vmatpush.msra.mxu0 %v67
    %94 = vmatpush.msra.mxu0 %v66
    %95 = vmatpush.msra.mxu0 %v65
    %96 = vmatpush.msra.mxu0 %v64
    %97 = vmatpush.msra.mxu0 %v63
    %98 = vmatmul.f32.gmra.mxu0 %v77
    %v99 = vpop.f32.mrf.mxu0
    %v100 = vadd.f32 %v73, %v99
    %101 = vmatmul.f32.gmra.mxu0 %v80
    %v102 = vpop.f32.mrf.mxu0
    %v103 = vadd.f32 %v73, %v102
    %104 = vdwg.mxu0
    %105 = vst.msk [vmem:[#allocation2] sm:$0xff] %vm31, %v100
    %106 = vst.msk [vmem:[#allocation2 + $0x8] sm:$0xff] %vm31, %v103
    // Predicated region
    $region22: #{tpu_custom_call.1} parent=1 // pred_check
      _
    $region23: #{tpu_custom_call.1} parent=1 // pred_check_branch
      %108 = sbr.rel (0) target = $region25
    $region24: #{tpu_custom_call.1} parent=1 // pred_region
      %110 = vsyncadd [#allocation3], 0
      %s111 = sshll.u32 [#allocation2], 4
      %s112 = int_to_ptr.vmem [resolvable:$true] %s111
      %s113 = sshll.u32 %s5, 4
      %s114 = int_to_ptr.hbm [resolvable:$true] %s113
      %119 = dma.vmem_to_hbm [thread:$0]  %s112, 256, %s114, [#allocation3], 128, 128, 8
    $region25: #{tpu_custom_call.1} parent=1 // pred_fallthru
      _
    // Predicated region
    $region26: #{tpu_custom_call.1} parent=1 // pred_check
      _
    $region27: #{tpu_custom_call.1} parent=1 // pred_check_branch
      %121 = sbr.rel (0) target = $region29
    $region28: #{tpu_custom_call.1} parent=1 // pred_region
      %123 = dma.done [#allocation3], 256
    $region29: #{tpu_custom_call.1} parent=1 // pred_fallthru
      _
    %124 = vsyncpa [#allocation3], 1

</llo_original>
